<compile_context>
chip_gen: v5e
topology: v5e:2x2
jax: 0.10.0
libtpu: 0.0.40
codegen_flags: <defaults>
</compile_context>

<pallas_src>
import functools

import jax
import jax.numpy as jnp
from jax.experimental import pallas as pl
from jax.experimental.pallas import tpu as pltpu  # noqa: F401  (TPU backend)

NUM_VOCAB = 21  # len(AMINO_ACID)
PAD_TOKEN = 20  # 'X'


def _round_up(x, m):
    return (x + m - 1) // m * m


# ---------------------------------------------------------------------------
# Shared fused conv1: one-hot im2col built once + single (H0, 3V) @ (3V, W)
# matmul, channel-major output (channels on sublanes, packed positions on
# lanes).
# ---------------------------------------------------------------------------
def _fused_conv1(tok, w1c, b1c):
    # tok: (1, P) int32   w1c: (H0, 3*V) bf16   b1c: (H0, 1) f32
    # returns h1: (H0, P-2) bf16
    V = w1c.shape[1] // 3
    P = tok.shape[1]
    W1 = P - 2
    # oh[k*V + v, p] = (tok[p + k] == v), built with a single compare against a
    # select-assembled target matrix (no concatenate, no per-tap rebuild).
    row = jax.lax.broadcasted_iota(jnp.int32, (3 * V, W1), 0)
    tgt = jnp.where(row < V, tok[:, 0:W1],
                    jnp.where(row < 2 * V,
                              tok[:, 1:1 + W1] + V,
                              tok[:, 2:2 + W1] + 2 * V))
    oh = jnp.where(row == tgt, 1.0, 0.0).astype(jnp.bfloat16)          # (3V, W1)
    h1 = jnp.dot(w1c, oh, preferred_element_type=jnp.float32)          # (H0, W1)
    return jnp.maximum(h1 + b1c, 0.0).astype(jnp.bfloat16)


# ---------------------------------------------------------------------------
# Eval kernel: whole batch packed on the LANE axis, one invocation.
# conv1 and conv2 are ONE matmul each; output is a lane-dense (H1, W2) slab
# with W2 a multiple of 128 (unmasked stores).
# ---------------------------------------------------------------------------
def conv_eval_kernel(tok_ref, w1c_ref, b1c_ref, w2c_ref, b2c_ref, out_ref):
    # tok_ref: (1, P) int32        w1c_ref: (H0, 3V) bf16   b1c_ref: (H0, 1) f32
    # w2c_ref: (H1, 3*H0) bf16     b2c_ref: (H1, 1) f32     out_ref: (H1, P-4) f32
    P = tok_ref.shape[1]
    W2 = P - 4

    h1 = _fused_conv1(tok_ref[...], w1c_ref[...], b1c_ref[...])        # (H0, P-2)

    # im2col for conv2: stack the 3 shifted windows along the channel
    # (sublane) axis -> (3*H0, W2).  Pieces are 32-row (tile-aligned) blocks.
    h1cat = jnp.concatenate(
        [h1[:, 0:W2], h1[:, 1:1 + W2], h1[:, 2:2 + W2]], axis=0)

    out = jnp.dot(w2c_ref[...], h1cat, preferred_element_type=jnp.float32)
    out_ref[...] = out + b2c_ref[...]                                   # (H1, W2)
    # Columns that straddle a batch boundary (or hit the pad tail) are garbage;
    # the wrapper slices them away.


def run_conv_eval(tokens, w1, b1, w2, b2):
    # tokens: (B, L) int32; w1: (H0, V, 3); b1: (H0,); w2: (H1, H0, 3); b2: (H1,)
    B, L = tokens.shape
    H0, V, _ = w1.shape
    H1 = w2.shape[0]
    BL = B * L

    W2 = _round_up(BL, 128)          # lane-dense output width (multiple of 128)
    P = W2 + 4                       # padded packed-stream length

    tok_flat = tokens.reshape(1, BL).astype(jnp.int32)
    tok_pad = jnp.pad(tok_flat, ((0, 0), (0, P - BL)),
                      constant_values=PAD_TOKEN)

    # im2col weight layouts: w1c[h, k*V + v] = w1[h, v, k]; same for w2c.
    w1c = jnp.transpose(w1, (0, 2, 1)).reshape(H0, 3 * V).astype(jnp.bfloat16)
    w2c = jnp.transpose(w2, (0, 2, 1)).reshape(H1, 3 * H0).astype(jnp.bfloat16)
    b1c = b1.reshape(H0, 1).astype(jnp.float32)
    b2c = b2.reshape(H1, 1).astype(jnp.float32)

    # TODO(synk): at production B*L, block the packed-position axis with a
    # "parallel" grid (halo'd token blocks) for v7x's second TensorCore and
    # DMA double-buffering; a single invocation is optimal at demo sizes.
    hid_packed = pl.pallas_call(
        conv_eval_kernel,
        out_shape=jax.ShapeDtypeStruct((H1, W2), jnp.float32),
    )(tok_pad, w1c, b1c, w2c, b2c)

    # Wrapper-side layout plumbing: (H1, W2) -> (B, H1, L-4).
    hid = hid_packed[:, :BL].reshape(H1, B, L)[:, :, : L - 4]
    return jnp.transpose(hid, (1, 0, 2))


# ---------------------------------------------------------------------------
# Training kernel: fused conv1 over the packed stream, then conv2 ONLY at the
# 2B sampled positions (selection matmul gather), then cosine-similarity
# cross-entropy.  Writes a single (1, 1) loss; no scratch buffers.
# ---------------------------------------------------------------------------
def train_fused_kernel(pos_ref, tok_ref, w1c_ref, b1c_ref, w2k_ref, b2r_ref,
                       loss_ref, *, tau):
    # pos_ref: (2B, 1) int32  (packed positions: rows 0..B-1 -> emb_1, B..2B-1 -> emb_2)
    # tok_ref: (1, B*L) int32
    # w1c_ref: (H0, 3V) bf16      b1c_ref: (H0, 1) f32
    # w2k_ref: (3, H0, H1) bf16   b2r_ref: (1, H1) f32
    # loss_ref: (1, 1) f32
    BL = tok_ref.shape[1]
    W1 = BL - 2
    TWO_B = pos_ref.shape[0]
    B = TWO_B // 2

    h1 = _fused_conv1(tok_ref[...], w1c_ref[...], b1c_ref[...])        # (H0, W1) bf16

    # Gathered conv2: emb[s] = sum_j h1[:, pos_s + j] . w2[:, :, j] + b2.
    # Each tap: selection matmul (2B, W1) x (H0, W1)^T -> (2B, H0), then
    # (2B, H0) @ (H0, H1).  Mathematically the single (2B, 3H0) @ (3H0, H1)
    # product; expressed as 3 accumulated MXU matmuls (native NT/NN forms).
    pos = pos_ref[...]                                                  # (2B, 1)
    lane = jax.lax.broadcasted_iota(jnp.int32, (TWO_B, W1), 1)
    acc = None
    for j in range(3):
        sel = jnp.where(lane == pos + j, 1.0, 0.0).astype(jnp.bfloat16)  # (2B, W1)
        g = jax.lax.dot_general(sel, h1, (((1,), (1,)), ((), ())),
                                preferred_element_type=jnp.float32)      # (2B, H0)
        d = jnp.dot(g.astype(jnp.bfloat16), w2k_ref[j],
                    preferred_element_type=jnp.float32)                  # (2B, H1)
        acc = d if acc is None else acc + d
    emb = acc + b2r_ref[...]                                             # (2B, H1)

    # Cosine-similarity matrix + cross entropy vs arange(B).
    e1 = emb[0:B, :]
    e2 = emb[B:TWO_B, :]
    inv1 = jax.lax.rsqrt(jnp.maximum(jnp.sum(e1 * e1, axis=1, keepdims=True), 1e-16))
    inv2 = jax.lax.rsqrt(jnp.maximum(jnp.sum(e2 * e2, axis=1, keepdims=True), 1e-16))
    logits = jax.lax.dot_general(
        e1 * inv1, e2 * inv2, (((1,), (1,)), ((), ())),
        preferred_element_type=jnp.float32) * (1.0 / tau)                # (B, B)

    m = jnp.max(logits, axis=1, keepdims=True)
    lse = m + jnp.log(jnp.sum(jnp.exp(logits - m), axis=1, keepdims=True))
    r = jax.lax.broadcasted_iota(jnp.int32, (B, B), 0)
    c = jax.lax.broadcasted_iota(jnp.int32, (B, B), 1)
    diag = jnp.sum(jnp.where(r == c, logits, 0.0), axis=1, keepdims=True)
    loss_ref[...] = jnp.sum(lse - diag, axis=0, keepdims=True) * (1.0 / B)


def run_train(tokens, w1, b1, w2, b2, rng_key, tau=0.1):
    B, L = tokens.shape
    H0, V, _ = w1.shape
    H1 = w2.shape[0]
    BL = B * L

    # seq_len and random index sampling (torch.rand replaced by jax.random).
    seq_len = jnp.sum(tokens != PAD_TOKEN, axis=-1, keepdims=True)       # (B, 1)
    rand = jax.random.uniform(rng_key, (B, 2), jnp.float32)
    random_index = (rand * (seq_len - 4).astype(jnp.float32)).astype(jnp.int32)
    # Clamp only guards degenerate sequences (<5 non-pad tokens) against OOB
    # selection; identical to the reference for valid inputs.
    random_index = jnp.clip(random_index, 0, L - 5)

    # Absolute packed positions, ordered [emb_1 rows..., emb_2 rows...].
    base = (jnp.arange(B, dtype=jnp.int32) * L)[:, None]                 # (B, 1)
    pos = jnp.transpose(base + random_index).reshape(2 * B, 1).astype(jnp.int32)

    tok_row = tokens.reshape(1, BL).astype(jnp.int32)                    # lane-major
    w1c = jnp.transpose(w1, (0, 2, 1)).reshape(H0, 3 * V).astype(jnp.bfloat16)
    w2k = jnp.transpose(w2, (2, 1, 0)).astype(jnp.bfloat16)              # (3, H0, H1)
    b1c = b1.reshape(H0, 1).astype(jnp.float32)
    b2r = b2.reshape(1, H1).astype(jnp.float32)

    kernel = functools.partial(train_fused_kernel, tau=tau)
    loss = pl.pallas_call(
        kernel,
        out_shape=jax.ShapeDtypeStruct((1, 1), jnp.float32),
    )(pos, tok_row, w1c, b1c, w2k, b2r)
    return loss[0, 0]


# ---------------------------------------------------------------------------
# Model wrapper
# ---------------------------------------------------------------------------
def init_params(key, hid_dims, num_vocab=NUM_VOCAB):
    h0, h1 = hid_dims
    k1, k2, k3, k4 = jax.random.split(key, 4)
    bound1 = 1.0 / jnp.sqrt(num_vocab * 3.0)
    bound2 = 1.0 / jnp.sqrt(h0 * 3.0)
    return {
        "w1": jax.random.uniform(k1, (h0, num_vocab, 3), jnp.float32, -bound1, bound1),
        "b1": jax.random.uniform(k2, (h0,), jnp.float32, -bound1, bound1),
        "w2": jax.random.uniform(k3, (h1, h0, 3), jnp.float32, -bound2, bound2),
        "b2": jax.random.uniform(k4, (h1,), jnp.float32, -bound2, bound2),
    }


def model_forward(x, params, rng_key, evaluation=False, tau=0.1):
    # x: (B, L) int32 tokens in [0, 21)
    if evaluation:
        hid_out = run_conv_eval(x, params["w1"], params["b1"],
                                params["w2"], params["b2"])
        return hid_out, None
    loss = run_train(x, params["w1"], params["b1"], params["w2"], params["b2"],
                     rng_key, tau=tau)
    return None, loss


if __name__ == "__main__":
    key = jax.random.PRNGKey(0)
    k_tok, k_param, k_rand = jax.random.split(key, 3)

    B, L = 4, 16
    hid_dims = (32, 64)

    # tokens in [0, 20) -> no padding, seq_len == L everywhere
    x = jax.random.randint(k_tok, (B, L), 0, PAD_TOKEN, dtype=jnp.int32)
    params = init_params(k_param, hid_dims)

    fwd = jax.jit(model_forward, static_argnames=("evaluation",))
    hid_out, _ = fwd(x, params, k_rand, evaluation=True)
    _, loss = fwd(x, params, k_rand, evaluation=False)

    jax.block_until_ready(hid_out)
    jax.block_until_ready(loss)

    assert hid_out.shape == (B, hid_dims[1], L - 4)
    assert jnp.isfinite(loss)
    print("KERNEL_OK")
</pallas_src>

<mosaic_0001>
module attributes {stable_mosaic.version = 11 : i64} {
  func.func @conv_eval_kernel(%arg0: memref<1x132xi32, #tpu.memory_space<vmem>>, %arg1: memref<32x63xbf16, #tpu.memory_space<vmem>>, %arg2: memref<32x1xf32, #tpu.memory_space<vmem>>, %arg3: memref<64x96xbf16, #tpu.memory_space<vmem>>, %arg4: memref<64x1xf32, #tpu.memory_space<vmem>>, %arg5: memref<64x128xf32, #tpu.memory_space<vmem>>) attributes {dimension_semantics = [], scalar_prefetch = 0 : i64, scratch_operands = 0 : i64, tpu.core_type = #tpu.core_type<tc>} {
    %c0 = arith.constant 0 : index
    %c0_0 = arith.constant 0 : index
    %0 = vector.load %arg0[%c0, %c0_0] : memref<1x132xi32, #tpu.memory_space<vmem>>, vector<1x132xi32>
    %c0_1 = arith.constant 0 : index
    %c0_2 = arith.constant 0 : index
    %1 = vector.load %arg1[%c0_1, %c0_2] : memref<32x63xbf16, #tpu.memory_space<vmem>>, vector<32x63xbf16>
    %c0_3 = arith.constant 0 : index
    %c0_4 = arith.constant 0 : index
    %2 = vector.load %arg2[%c0_3, %c0_4] : memref<32x1xf32, #tpu.memory_space<vmem>>, vector<32x1xf32>
    %3 = tpu.iota {dimensions = array<i32: 0>} : vector<63x130xi32>
    %c21_i32 = arith.constant 21 : i32
    %4 = vector.broadcast %c21_i32 : i32 to vector<63x130xi32>
    %5 = arith.cmpi slt, %3, %4 : vector<63x130xi32>
    %6 = vector.extract_strided_slice %0 {offsets = [0, 0], sizes = [1, 130], strides = [1, 1]} : vector<1x132xi32> to vector<1x130xi32>
    %c42_i32 = arith.constant 42 : i32
    %7 = vector.broadcast %c42_i32 : i32 to vector<63x130xi32>
    %8 = arith.cmpi slt, %3, %7 : vector<63x130xi32>
    %9 = vector.extract_strided_slice %0 {offsets = [0, 1], sizes = [1, 130], strides = [1, 1]} : vector<1x132xi32> to vector<1x130xi32>
    %c21_i32_5 = arith.constant 21 : i32
    %10 = vector.broadcast %c21_i32_5 : i32 to vector<1x130xi32>
    %11 = arith.addi %9, %10 : vector<1x130xi32>
    %12 = vector.extract_strided_slice %0 {offsets = [0, 2], sizes = [1, 130], strides = [1, 1]} : vector<1x132xi32> to vector<1x130xi32>
    %c42_i32_6 = arith.constant 42 : i32
    %13 = vector.broadcast %c42_i32_6 : i32 to vector<1x130xi32>
    %14 = arith.addi %12, %13 : vector<1x130xi32>
    %15 = vector.shape_cast %11 : vector<1x130xi32> to vector<1x130xi32>
    %16 = vector.broadcast %15 : vector<1x130xi32> to vector<63x130xi32>
    %17 = vector.shape_cast %14 : vector<1x130xi32> to vector<1x130xi32>
    %18 = vector.broadcast %17 : vector<1x130xi32> to vector<63x130xi32>
    %19 = arith.select %8, %16, %18 : vector<63x130xi1>, vector<63x130xi32>
    %20 = vector.shape_cast %6 : vector<1x130xi32> to vector<1x130xi32>
    %21 = vector.broadcast %20 : vector<1x130xi32> to vector<63x130xi32>
    %22 = arith.select %5, %21, %19 : vector<63x130xi1>, vector<63x130xi32>
    %23 = arith.cmpi eq, %3, %22 : vector<63x130xi32>
    %cst = arith.constant 1.000000e+00 : f32
    %cst_7 = arith.constant 0.000000e+00 : f32
    %24 = vector.broadcast %cst : f32 to vector<63x130xf32>
    %25 = vector.broadcast %cst_7 : f32 to vector<63x130xf32>
    %26 = arith.select %23, %24, %25 : vector<63x130xi1>, vector<63x130xf32>
    %27 = arith.truncf %26 : vector<63x130xf32> to vector<63x130xbf16>
    %cst_8 = arith.constant dense<0.000000e+00> : vector<32x130xf32>
    %28 = tpu.matmul %1, %27, %cst_8 {dimension_numbers = #tpu.dot_dimension_numbers<[1], [0], [0], [1], [0, 0, 1, 1], [], []>} : vector<32x63xbf16>, vector<63x130xbf16>, vector<32x130xf32> -> vector<32x130xf32>
    %29 = vector.broadcast %2 : vector<32x1xf32> to vector<32x130xf32>
    %30 = arith.addf %28, %29 : vector<32x130xf32>
    %cst_9 = arith.constant 0.000000e+00 : f32
    %31 = vector.broadcast %cst_9 : f32 to vector<32x130xf32>
    %32 = arith.maximumf %30, %31 : vector<32x130xf32>
    %33 = arith.truncf %32 : vector<32x130xf32> to vector<32x130xbf16>
    %34 = vector.extract_strided_slice %33 {offsets = [0, 0], sizes = [32, 128], strides = [1, 1]} : vector<32x130xbf16> to vector<32x128xbf16>
    %35 = vector.extract_strided_slice %33 {offsets = [0, 1], sizes = [32, 128], strides = [1, 1]} : vector<32x130xbf16> to vector<32x128xbf16>
    %36 = vector.extract_strided_slice %33 {offsets = [0, 2], sizes = [32, 128], strides = [1, 1]} : vector<32x130xbf16> to vector<32x128xbf16>
    %37 = tpu.concatenate %34, %35, %36 in 0 : vector<32x128xbf16>, vector<32x128xbf16>, vector<32x128xbf16> -> vector<96x128xbf16>
    %c0_10 = arith.constant 0 : index
    %c0_11 = arith.constant 0 : index
    %38 = vector.load %arg3[%c0_10, %c0_11] : memref<64x96xbf16, #tpu.memory_space<vmem>>, vector<64x96xbf16>
    %cst_12 = arith.constant dense<0.000000e+00> : vector<64x128xf32>
    %39 = tpu.matmul %38, %37, %cst_12 {dimension_numbers = #tpu.dot_dimension_numbers<[1], [0], [0], [1], [0, 0, 1, 1], [], []>} : vector<64x96xbf16>, vector<96x128xbf16>, vector<64x128xf32> -> vector<64x128xf32>
    %c0_13 = arith.constant 0 : index
    %c0_14 = arith.constant 0 : index
    %40 = vector.load %arg4[%c0_13, %c0_14] : memref<64x1xf32, #tpu.memory_space<vmem>>, vector<64x1xf32>
    %41 = vector.broadcast %40 : vector<64x1xf32> to vector<64x128xf32>
    %42 = arith.addf %39, %41 : vector<64x128xf32>
    %c0_15 = arith.constant 0 : index
    %c0_16 = arith.constant 0 : index
    %43 = vector.load %arg5[%c0_15, %c0_16] : memref<64x128xf32, #tpu.memory_space<vmem>>, vector<64x128xf32>
    tpu.vector_store %arg5[%c0_15, %c0_16], %42 {strides = array<i32>} : memref<64x128xf32, #tpu.memory_space<vmem>>, vector<64x128xf32>,
    return
  }
}

</mosaic_0001>

<llo_original>
// kernel: model_forward.1
$region0: #{model_forward.1}
  #allocation0 [shape = 'u32[]', space=smem, size = 0x4, offset = 0x4, fixed_abs, tag = 'smem constant byte address 0x4 - core index']
  #allocation1 [shape = 'u32[72,128]{1,0:T(1,128)}', space=vmem, size = 0x9000, scoped, tag = 'internal scratch']
  %s0 = inlined_call_operand.vmem [shape: s32[1,132], index: 0, kind: input, shape index: {}]
  %s1 = inlined_call_operand.vmem [shape: bf16[32,63], index: 1, kind: input, shape index: {}]
  %s2 = inlined_call_operand.vmem [shape: f32[32,1], index: 2, kind: input, shape index: {}]
  %s3 = inlined_call_operand.vmem [shape: bf16[64,96], index: 3, kind: input, shape index: {}]
  %s4 = inlined_call_operand.vmem [shape: f32[64,1], index: 4, kind: input, shape index: {}]
  %s5 = inlined_call_operand.vmem [shape: f32[64,128], index: 5, kind: output, shape index: {}]
  %s6 = sld [smem:[#allocation0]]
  $region30: #{model_forward.1} parent=0
    _
  %s8 = ssub.s32 1, %s6
  %s9 = scalar_select 0, %s8, %s6
  // Predicated region
  $region2: #{model_forward.1} parent=0 // pred_check
    _
  $region3: #{model_forward.1} parent=0 // pred_check_branch
    %11 = sbr.rel (0) target = $region5
  $region4: #{model_forward.1} parent=0 // pred_region
    _
  $region5: #{model_forward.1} parent=0 // pred_fallthru
    _
  // Predicated region
  $region6: #{model_forward.1} parent=0 // pred_check
    _
  $region7: #{model_forward.1} parent=0 // pred_check_branch
    %13 = sbr.rel (0) target = $region9
  $region8: #{model_forward.1} parent=0 // pred_region
    _
  $region9: #{model_forward.1} parent=0 // pred_fallthru
    _
  // Predicated region
  $region10: #{model_forward.1} parent=0 // pred_check
    _
  $region11: #{model_forward.1} parent=0 // pred_check_branch
    %15 = sbr.rel (0) target = $region13
  $region12: #{model_forward.1} parent=0 // pred_region
    _
  $region13: #{model_forward.1} parent=0 // pred_fallthru
    _
  // Predicated region
  $region14: #{model_forward.1} parent=0 // pred_check
    _
  $region15: #{model_forward.1} parent=0 // pred_check_branch
    %17 = sbr.rel (0) target = $region17
  $region16: #{model_forward.1} parent=0 // pred_region
    _
  $region17: #{model_forward.1} parent=0 // pred_fallthru
    _
  // Predicated region
  $region18: #{model_forward.1} parent=0 // pred_check
    _
  $region19: #{model_forward.1} parent=0 // pred_check_branch
    %19 = sbr.rel (0) target = $region21
  $region20: #{model_forward.1} parent=0 // pred_region
    _
  $region21: #{model_forward.1} parent=0 // pred_fallthru
    _
  %v21 = vld [vmem:[%s0] sm:$0x3]
  %v22 = vld [vmem:[%s1] sm:$0xf]
  %v23 = vld [vmem:[%s1 + $0x4] sm:$0xf]
  %v24 = vld [vmem:[%s1 + $0x8] sm:$0xf]
  %v25 = vld [vmem:[%s1 + $0xc] sm:$0xf]
  %v26 = vld [vmem:[%s2] sm:$0xff]
  %v27 = vld [vmem:[%s2 + $0x8] sm:$0xff]
  %v28 = vld [vmem:[%s2 + $0x10] sm:$0xff]
  %v29 = vld [vmem:[%s2 + $0x18] sm:$0xff]
  %v30 = vlaneseq
  %v31 = vshrl.u32 %v30, 7
  %v32 = vadd.s32 %v31, 8
  %v33 = vadd.s32 %v31, 16
  %v34 = vadd.s32 %v31, 24
  %v35 = vadd.s32 %v31, 32
  %v36 = vadd.s32 %v31, 40
  %v37 = vadd.s32 %v31, 48
  %v38 = vadd.s32 %v31, 56
  %vm39 = vcmp.lt.s32.totalorder %v31, 21
  %vm40 = vcmp.lt.s32.totalorder %v32, 21
  %vm41 = vcmp.lt.s32.totalorder %v33, 21
  %vm42 = vcmp.lt.s32.totalorder %v34, 21
  %vm43 = vcmp.lt.s32.totalorder %v35, 21
  %vm44 = vcmp.lt.s32.totalorder %v36, 21
  %vm45 = vcmp.lt.s32.totalorder %v37, 21
  %vm46 = vcmp.lt.s32.totalorder %v38, 21
  %vm47 = vcmp.lt.s32.totalorder %v31, 42
  %vm48 = vcmp.lt.s32.totalorder %v32, 42
  %vm49 = vcmp.lt.s32.totalorder %v33, 42
  %vm50 = vcmp.lt.s32.totalorder %v34, 42
  %vm51 = vcmp.lt.s32.totalorder %v35, 42
  %vm52 = vcmp.lt.s32.totalorder %v36, 42
  %vm53 = vcmp.lt.s32.totalorder %v37, 42
  %vm54 = vcmp.lt.s32.totalorder %v38, 42
  %v55 = vadd.s32 %v21, 21
  %v56 = vadd.s32 %v21, 42
  %v57 = vperm.slane %v55, 0
  %v58 = vperm.slane %v55, 1
  %v59 = vperm.slane %v56, 0
  %v60 = vperm.slane %v56, 1
  %61 = vrot.lane.b32.xlu0 %v59, 127
  %v62 = vpop.permute.xlu0 %61
  %63 = vrot.lane.b32.xlu0 %v60, 127
  %v64 = vpop.permute.xlu0 %63
  %vm65 = vcmask 1039360
  %v66 = vsel %vm65, %v62, %v64
  %v67 = vsel %vm47, %v57, %v66
  %v68 = vsel %vm47, %v58, %v64
  %v69 = vsel %vm48, %v57, %v66
  %v70 = vsel %vm48, %v58, %v64
  %v71 = vsel %vm49, %v57, %v66
  %v72 = vsel %vm49, %v58, %v64
  %v73 = vsel %vm50, %v57, %v66
  %v74 = vsel %vm50, %v58, %v64
  %v75 = vsel %vm51, %v57, %v66
  %v76 = vsel %vm51, %v58, %v64
  %v77 = vsel %vm52, %v57, %v66
  %v78 = vsel %vm52, %v58, %v64
  %v79 = vsel %vm53, %v57, %v66
  %v80 = vsel %vm53, %v58, %v64
  %v81 = vsel %vm54, %v57, %v66
  %v82 = vsel %vm54, %v58, %v64
  %v83 = vperm.slane %v21, 0
  %v84 = vperm.slane %v21, 1
  %85 = vrot.lane.b32.xlu0 %v67, 127
  %v86 = vpop.permute.xlu0 %85
  %87 = vrot.lane.b32.xlu0 %v68, 127
  %v88 = vpop.permute.xlu0 %87
  %89 = vrot.lane.b32.xlu0 %v69, 127
  %v90 = vpop.permute.xlu0 %89
  %91 = vrot.lane.b32.xlu0 %v70, 127
  %v92 = vpop.permute.xlu0 %91
  %93 = vrot.lane.b32.xlu0 %v71, 127
  %v94 = vpop.permute.xlu0 %93
  %95 = vrot.lane.b32.xlu0 %v72, 127
  %v96 = vpop.permute.xlu0 %95
  %97 = vrot.lane.b32.xlu0 %v73, 127
  %v98 = vpop.permute.xlu0 %97
  %99 = vrot.lane.b32.xlu0 %v74, 127
  %v100 = vpop.permute.xlu0 %99
  %101 = vrot.lane.b32.xlu0 %v75, 127
  %v102 = vpop.permute.xlu0 %101
  %103 = vrot.lane.b32.xlu0 %v76, 127
  %v104 = vpop.permute.xlu0 %103
  %105 = vrot.lane.b32.xlu0 %v77, 127
  %v106 = vpop.permute.xlu0 %105
  %107 = vrot.lane.b32.xlu0 %v78, 127
  %v108 = vpop.permute.xlu0 %107
  %109 = vrot.lane.b32.xlu0 %v79, 127
  %v110 = vpop.permute.xlu0 %109
  %111 = vrot.lane.b32.xlu0 %v80, 127
  %v112 = vpop.permute.xlu0 %111
  %113 = vrot.lane.b32.xlu0 %v81, 127
  %v114 = vpop.permute.xlu0 %113
  %115 = vrot.lane.b32.xlu0 %v82, 127
  %v116 = vpop.permute.xlu0 %115
  %v117 = vsel %vm65, %v86, %v88
  %v118 = vsel %vm65, %v90, %v92
  %v119 = vsel %vm65, %v94, %v96
  %v120 = vsel %vm65, %v98, %v100
  %v121 = vsel %vm65, %v102, %v104
  %v122 = vsel %vm65, %v106, %v108
  %v123 = vsel %vm65, %v110, %v112
  %v124 = vsel %vm65, %v114, %v116
  %v125 = vsel %vm39, %v83, %v117
  %v126 = vsel %vm39, %v84, %v88
  %v127 = vsel %vm40, %v83, %v118
  %v128 = vsel %vm40, %v84, %v92
  %v129 = vsel %vm41, %v83, %v119
  %v130 = vsel %vm41, %v84, %v96
  %v131 = vsel %vm42, %v83, %v120
  %v132 = vsel %vm42, %v84, %v100
  %v133 = vsel %vm43, %v83, %v121
  %v134 = vsel %vm43, %v84, %v104
  %v135 = vsel %vm44, %v83, %v122
  %v136 = vsel %vm44, %v84, %v108
  %v137 = vsel %vm45, %v83, %v123
  %v138 = vsel %vm45, %v84, %v112
  %v139 = vsel %vm46, %v83, %v124
  %v140 = vsel %vm46, %v84, %v116
  %vm141 = vcmp.eq.s32.totalorder %v31, %v125
  %vm142 = vcmp.eq.s32.totalorder %v31, %v126
  %vm143 = vcmp.eq.s32.totalorder %v32, %v127
  %vm144 = vcmp.eq.s32.totalorder %v32, %v128
  %vm145 = vcmp.eq.s32.totalorder %v33, %v129
  %vm146 = vcmp.eq.s32.totalorder %v33, %v130
  %vm147 = vcmp.eq.s32.totalorder %v34, %v131
  %vm148 = vcmp.eq.s32.totalorder %v34, %v132
  %vm149 = vcmp.eq.s32.totalorder %v35, %v133
  %vm150 = vcmp.eq.s32.totalorder %v35, %v134
  %vm151 = vcmp.eq.s32.totalorder %v36, %v135
  %vm152 = vcmp.eq.s32.totalorder %v36, %v136
  %vm153 = vcmp.eq.s32.totalorder %v37, %v137
  %vm154 = vcmp.eq.s32.totalorder %v37, %v138
  %vm155 = vcmp.eq.s32.totalorder %v38, %v139
  %vm156 = vcmp.eq.s32.totalorder %v38, %v140
  %v157 = vsel %vm141, 1.0, 0.0
  %v158 = vsel %vm142, 1.0, 0.0
  %v159 = vsel %vm143, 1.0, 0.0
  %v160 = vsel %vm144, 1.0, 0.0
  %v161 = vsel %vm145, 1.0, 0.0
  %v162 = vsel %vm146, 1.0, 0.0
  %v163 = vsel %vm147, 1.0, 0.0
  %v164 = vsel %vm148, 1.0, 0.0
  %v165 = vsel %vm149, 1.0, 0.0
  %v166 = vsel %vm150, 1.0, 0.0
  %v167 = vsel %vm151, 1.0, 0.0
  %v168 = vsel %vm152, 1.0, 0.0
  %v169 = vsel %vm153, 1.0, 0.0
  %v170 = vsel %vm154, 1.0, 0.0
  %v171 = vsel %vm155, 1.0, 0.0
  %v172 = vsel %vm156, 1.0, 0.0
  %v173 = vpack.c.bf16 %v159, %v157
  %v174 = vpack.c.bf16 %v160, %v158
  %v175 = vpack.c.bf16 %v163, %v161
  %v176 = vpack.c.bf16 %v164, %v162
  %v177 = vpack.c.bf16 %v167, %v165
  %v178 = vpack.c.bf16 %v168, %v166
  %v179 = vpack.c.bf16 %v171, %v169
  %v180 = vpack.c.bf16 %v172, %v170
  %182 = vset.pattern.permute.xlu0 0
  %183 = vperm.xlu0 %182, %v26
  %v184 = vpop.permute.xlu0 %183
  %187 = vset.pattern.permute.xlu0 0
  %188 = vperm.xlu0 %187, %v27
  %v189 = vpop.permute.xlu0 %188
  %192 = vset.pattern.permute.xlu0 0
  %193 = vperm.xlu0 %192, %v28
  %v194 = vpop.permute.xlu0 %193
  %197 = vset.pattern.permute.xlu0 0
  %198 = vperm.xlu0 %197, %v29
  %v199 = vpop.permute.xlu0 %198
  %v205 = vunpack.c.l.b16 %v22
  %v206 = vunpack.c.l.b16 %v23
  %v207 = vunpack.c.l.b16 %v24
  %v208 = vunpack.c.l.b16 %v25
  %v209 = vpack.c.b16 %v206, %v205
  %v210 = vpack.c.b16 %v208, %v207
  %vm211 = vcmask 515072
  %v213 = vsel %vm211, %v209, 0
  %v216 = vsel %vm211, %v210, 0
  %vm218 = vcmask 1046528
  %vm219 = vcmask 1047552
  %v220 = vsel %vm218, 4294967295, 65535
  %v221 = vsel %vm219, %v220, 0
  %v223 = vand.u32 %v179, %v221
  %v226 = vand.u32 %v180, %v221
  %228 = vmatpush.bf16.msra.mxu0 0
  %229 = vmatpush.bf16.msra.mxu0 0
  %230 = vmatpush.bf16.msra.mxu0 0
  %231 = vmatpush.bf16.msra.mxu0 0
  %232 = vmatpush.bf16.msra.mxu0 %v223
  %233 = vmatpush.bf16.msra.mxu0 %v177
  %234 = vmatpush.bf16.msra.mxu0 %v175
  %235 = vmatpush.bf16.msra.mxu0 %v173
  %236 = vmatmul.bf16.gmra.mxu0 %v213
  %v237 = vpop.f32.mrf.mxu0
  %v238 = vadd.f32 %v184, %v237
  %v239 = vpop.f32.mrf.mxu0
  %v240 = vadd.f32 %v189, %v239
  %241 = vmatmul.bf16.gmra.mxu0 %v216
  %v242 = vpop.f32.mrf.mxu0
  %v243 = vadd.f32 %v194, %v242
  %v244 = vpop.f32.mrf.mxu0
  %v245 = vadd.f32 %v199, %v244
  %246 = vdwg.mxu0
  %247 = vmatpush.bf16.msra.mxu0 0
  %248 = vmatpush.bf16.msra.mxu0 0
  %249 = vmatpush.bf16.msra.mxu0 0
  %250 = vmatpush.bf16.msra.mxu0 0
  %251 = vmatpush.bf16.msra.mxu0 %v226
  %252 = vmatpush.bf16.msra.mxu0 %v178
  %253 = vmatpush.bf16.msra.mxu0 %v176
  %254 = vmatpush.bf16.msra.mxu0 %v174
  %255 = vmatmul.bf16.gmra.mxu0 %v213
  %v256 = vpop.f32.mrf.mxu0
  %v257 = vadd.f32 %v184, %v256
  %v258 = vpop.f32.mrf.mxu0
  %v259 = vadd.f32 %v189, %v258
  %260 = vmatmul.bf16.gmra.mxu0 %v216
  %v261 = vpop.f32.mrf.mxu0
  %v262 = vadd.f32 %v194, %v261
  %v263 = vpop.f32.mrf.mxu0
  %v264 = vadd.f32 %v199, %v263
  %265 = vdwg.mxu0
  %v266 = vmax.f32 %v238, 0.0
  %v267 = vmax.f32 %v257, 0.0
  %v268 = vmax.f32 %v240, 0.0
  %v269 = vmax.f32 %v259, 0.0
  %v270 = vmax.f32 %v243, 0.0
  %v271 = vmax.f32 %v262, 0.0
  %v272 = vmax.f32 %v245, 0.0
  %v273 = vmax.f32 %v264, 0.0
  %v274 = vpack.c.bf16 %v267, %v266
  %v275 = vpack.c.bf16 %v269, %v268
  %v276 = vpack.c.bf16 %v271, %v270
  %v277 = vpack.c.bf16 %v273, %v272
  %v282 = vunpack.c.l.b16 %v274
  %v283 = vunpack.c.l.b16 %v275
  %v284 = vunpack.c.l.b16 %v276
  %v285 = vunpack.c.l.b16 %v277
  %v286 = vpack.c.b16 %v283, %v282
  %v287 = vpack.c.b16 %v285, %v284
  %v290 = vunpack.c.h.b16 %v274
  %v291 = vunpack.c.h.b16 %v275
  %v292 = vunpack.c.h.b16 %v276
  %v293 = vunpack.c.h.b16 %v277
  %v294 = vpack.c.b16 %v291, %v290
  %v295 = vpack.c.b16 %v293, %v292
  %296 = vrot.lane.b32.xlu0 %v286, 127
  %v297 = vpop.permute.xlu0 %296
  %298 = vrot.lane.b32.xlu0 %v294, 127
  %v299 = vpop.permute.xlu0 %298
  %300 = vrot.lane.b32.xlu0 %v287, 127
  %v301 = vpop.permute.xlu0 %300
  %302 = vrot.lane.b32.xlu0 %v295, 127
  %v303 = vpop.permute.xlu0 %302
  %vm304 = vcmask 1039360
  %v305 = vsel %vm304, %v297, %v299
  %v306 = vsel %vm304, %v301, %v303
  %309 = vrot.lane.b32.xlu0 %v286, 126
  %v310 = vpop.permute.xlu0 %309
  %311 = vrot.lane.b32.xlu0 %v294, 126
  %v312 = vpop.permute.xlu0 %311
  %313 = vrot.lane.b32.xlu0 %v287, 126
  %v314 = vpop.permute.xlu0 %313
  %315 = vrot.lane.b32.xlu0 %v295, 126
  %v316 = vpop.permute.xlu0 %315
  %vm317 = vcmask 1031168
  %v318 = vsel %vm317, %v310, %v312
  %v319 = vsel %vm317, %v314, %v316
  %v322 = vld [vmem:[%s3] sm:$0xf]
  %v323 = vld [vmem:[%s3 + $0x4] sm:$0xf]
  %v324 = vld [vmem:[%s3 + $0x8] sm:$0xf]
  %v325 = vld [vmem:[%s3 + $0xc] sm:$0xf]
  %v326 = vld [vmem:[%s3 + $0x10] sm:$0xf]
  %v327 = vld [vmem:[%s3 + $0x14] sm:$0xf]
  %v328 = vld [vmem:[%s3 + $0x18] sm:$0xf]
  %v329 = vld [vmem:[%s3 + $0x1c] sm:$0xf]
  %v330 = vld [vmem:[%s4] sm:$0xff]
  %v331 = vld [vmem:[%s4 + $0x8] sm:$0xff]
  %v332 = vld [vmem:[%s4 + $0x10] sm:$0xff]
  %v333 = vld [vmem:[%s4 + $0x18] sm:$0xff]
  %v334 = vld [vmem:[%s4 + $0x20] sm:$0xff]
  %v335 = vld [vmem:[%s4 + $0x28] sm:$0xff]
  %v336 = vld [vmem:[%s4 + $0x30] sm:$0xff]
  %v337 = vld [vmem:[%s4 + $0x38] sm:$0xff]
  %339 = vset.pattern.permute.xlu0 0
  %340 = vperm.xlu0 %339, %v330
  %v341 = vpop.permute.xlu0 %340
  %344 = vset.pattern.permute.xlu0 0
  %345 = vperm.xlu0 %344, %v331
  %v346 = vpop.permute.xlu0 %345
  %349 = vset.pattern.permute.xlu0 0
  %350 = vperm.xlu0 %349, %v332
  %v351 = vpop.permute.xlu0 %350
  %354 = vset.pattern.permute.xlu0 0
  %355 = vperm.xlu0 %354, %v333
  %v356 = vpop.permute.xlu0 %355
  %359 = vset.pattern.permute.xlu0 0
  %360 = vperm.xlu0 %359, %v334
  %v361 = vpop.permute.xlu0 %360
  %364 = vset.pattern.permute.xlu0 0
  %365 = vperm.xlu0 %364, %v335
  %v366 = vpop.permute.xlu0 %365
  %369 = vset.pattern.permute.xlu0 0
  %370 = vperm.xlu0 %369, %v336
  %v371 = vpop.permute.xlu0 %370
  %374 = vset.pattern.permute.xlu0 0
  %375 = vperm.xlu0 %374, %v337
  %v376 = vpop.permute.xlu0 %375
  %v386 = vunpack.c.l.b16 %v322
  %v387 = vunpack.c.l.b16 %v323
  %v388 = vunpack.c.l.b16 %v324
  %v389 = vunpack.c.l.b16 %v325
  %v390 = vunpack.c.l.b16 %v326
  %v391 = vunpack.c.l.b16 %v327
  %v392 = vunpack.c.l.b16 %v328
  %v393 = vunpack.c.l.b16 %v329
  %v394 = vpack.c.b16 %v387, %v386
  %v395 = vpack.c.b16 %v389, %v388
  %v396 = vpack.c.b16 %v391, %v390
  %v397 = vpack.c.b16 %v393, %v392
  %vm398 = vcmask 785408
  %v400 = vsel %vm398, %v394, 0
  %v403 = vsel %vm398, %v395, 0
  %v406 = vsel %vm398, %v396, 0
  %v409 = vsel %vm398, %v397, 0
  %411 = vmatpush.bf16.msra.mxu0 0
  %412 = vmatpush.bf16.msra.mxu0 0
  %413 = vmatpush.bf16.msra.mxu0 %v319
  %414 = vmatpush.bf16.msra.mxu0 %v318
  %415 = vmatpush.bf16.msra.mxu0 %v306
  %416 = vmatpush.bf16.msra.mxu0 %v305
  %417 = vmatpush.bf16.msra.mxu0 %v287
  %418 = vmatpush.bf16.msra.mxu0 %v286
  %419 = vmatmul.bf16.gmra.mxu0 %v400
  %v420 = vpop.f32.mrf.mxu0
  %v421 = vadd.f32 %v341, %v420
  %v422 = vpop.f32.mrf.mxu0
  %v423 = vadd.f32 %v346, %v422
  %424 = vmatmul.bf16.gmra.mxu0 %v403
  %v425 = vpop.f32.mrf.mxu0
  %v426 = vadd.f32 %v351, %v425
  %v427 = vpop.f32.mrf.mxu0
  %v428 = vadd.f32 %v356, %v427
  %429 = vmatmul.bf16.gmra.mxu0 %v406
  %v430 = vpop.f32.mrf.mxu0
  %v431 = vadd.f32 %v361, %v430
  %v432 = vpop.f32.mrf.mxu0
  %v433 = vadd.f32 %v366, %v432
  %434 = vmatmul.bf16.gmra.mxu0 %v409
  %v435 = vpop.f32.mrf.mxu0
  %v436 = vadd.f32 %v371, %v435
  %v437 = vpop.f32.mrf.mxu0
  %v438 = vadd.f32 %v376, %v437
  %439 = vdwg.mxu0
  %440 = vst [vmem:[%s5] sm:$0xff] %v421
  %441 = vst [vmem:[%s5 + $0x8] sm:$0xff] %v423
  %442 = vst [vmem:[%s5 + $0x10] sm:$0xff] %v426
  %443 = vst [vmem:[%s5 + $0x18] sm:$0xff] %v428
  %444 = vst [vmem:[%s5 + $0x20] sm:$0xff] %v431
  %445 = vst [vmem:[%s5 + $0x28] sm:$0xff] %v433
  %446 = vst [vmem:[%s5 + $0x30] sm:$0xff] %v436
  %447 = vst [vmem:[%s5 + $0x38] sm:$0xff] %v438
  // Predicated region
  $region22: #{model_forward.1} parent=0 // pred_check
    _
  $region23: #{model_forward.1} parent=0 // pred_check_branch
    %449 = sbr.rel (0) target = $region25
  $region24: #{model_forward.1} parent=0 // pred_region
    _
  $region25: #{model_forward.1} parent=0 // pred_fallthru
    _
  // Predicated region
  $region26: #{model_forward.1} parent=0 // pred_check
    _
  $region27: #{model_forward.1} parent=0 // pred_check_branch
    %451 = sbr.rel (0) target = $region29
  $region28: #{model_forward.1} parent=0 // pred_region
    _
  $region29: #{model_forward.1} parent=0 // pred_fallthru
    _

</llo_original>
